<compile_context>
chip_gen: v5e
topology: v5e:2x2
jax: 0.10.0
libtpu: 0.0.40
codegen_flags: <defaults>
</compile_context>

<pallas_src>
import functools
import math

import jax
import jax.numpy as jnp
import numpy as np
from jax import lax
from jax.experimental import pallas as pl
from jax.experimental.pallas import tpu as pltpu


NEG_SLOPE = 0.2    # LeakyReLU negative slope used by B.conv_block('lrelu')
_LANE = 128        # lane tile
_CTILE = 16        # bf16 sublane tile (channel chunks are padded to this)

# (name, ksize, dilation, padding) in forward order.
# TODO(synk): B.up_block assumed = nearest-upsample x2 -> 3x3 conv (pad 1) -> LeakyReLU(0.2).
_CONV_DEFS = (
    ("enc0_0", 3, 1, 1),
    ("enc0_1", 3, 1, 1),
    ("enc1_down", 4, 1, 1),
    ("enc1_0", 3, 1, 1),
    ("enc1_1", 3, 1, 1),
    ("cen_down", 4, 1, 1),
    ("cen_0", 3, 1, 1),
    ("cen_1", 3, 2, 2),
    ("cen_2", 3, 2, 2),
    ("cen_3", 3, 1, 1),
    ("cen_up", 3, 1, 1),
    ("dec1_0", 3, 1, 1),
    ("dec1_1", 3, 1, 1),
    ("dec1_up", 3, 1, 1),
    ("dec2_0", 3, 1, 1),
    ("dec2_1", 3, 1, 1),
    ("end", 1, 1, 0),
)


def _ilog2(v):
    l = int(v).bit_length() - 1
    assert (1 << l) == v, f"{v} must be a power of two"
    return l


def _round_up(v, m):
    return ((v + m - 1) // m) * m


# ------------------------------ fused kernel ------------------------------- #

def _diae_kernel(x_ref, w_ref, b_ref, dn1_ref, dn2_ref, up2_ref, up1_ref,
                 out_ref, stk_ref, *, meta, geom, out_ch, roll_like_jnp):
    """geom[level] = (H, W, Mp): per-image dims and padded flat lane count.
    meta[name] = dict(off, k, cout, bidx, ksize, dil, pad, cin)."""

    # Trace-level memo: boundary masks built once per (level, di, dj).
    mask_cache = {}

    def valid_mask(level, di, dj):
        if di == 0 and dj == 0:
            return None
        key = (level, di, dj)
        if key not in mask_cache:
            H, W, Mp = geom[level]
            r = lax.broadcasted_iota(jnp.int32, (1, Mp), 1)
            i = jnp.bitwise_and(jnp.right_shift(r, _ilog2(W)), H - 1)   # row in image
            j = jnp.bitwise_and(r, W - 1)                               # col in image
            ii, jj = i + di, j + dj
            mask_cache[key] = (ii >= 0) & (ii < H) & (jj >= 0) & (jj < W)
        return mask_cache[key]

    def conv(name, parts, level, act):
        """Stride-1 conv on flat [Cin, Mp] activations, decomposed as ONE bf16
        matmul [Cout, K] x [K, Mp] with K = ksize*ksize*sum(Cin).  `parts` is
        the list of channel-concatenated inputs (skip-connection concat is
        folded into the contraction dimension)."""
        m = meta[name]
        ksize, dil, pad = m["ksize"], m["dil"], m["pad"]
        H, W, Mp = geom[level]
        parts = [p.astype(jnp.bfloat16) for p in parts]
        row = 0
        for a in range(ksize):
            for bcol in range(ksize):
                di = a * dil - pad
                dj = bcol * dil - pad
                s = di * W + dj
                msk = valid_mask(level, di, dj)
                for xb in parts:
                    cin_p = xb.shape[0]
                    if s == 0:
                        tap = xb
                    else:
                        # lane rotation on the XLU; jnp.roll semantics probed once in main()
                        shift = (-s) % Mp if roll_like_jnp else s % Mp
                        tap = pltpu.roll(xb, shift, 1)
                    if msk is not None:
                        tap = jnp.where(msk, tap, jnp.zeros_like(tap))
                    stk_ref[row:row + cin_p, 0:Mp] = tap
                    row += cin_p
        assert row == m["k"], (name, row, m["k"])
        w = w_ref[0:m["cout"], m["off"]:m["off"] + m["k"]]
        acc = jnp.dot(w, stk_ref[0:m["k"], 0:Mp],
                      preferred_element_type=jnp.float32)
        acc = acc + b_ref[0:m["cout"], m["bidx"]:m["bidx"] + 1]
        if act == "lrelu":
            acc = jnp.where(acc >= 0, acc, NEG_SLOPE * acc)
        elif act == "tanh":
            acc = jnp.tanh(acc)
        elif act is not None:
            raise ValueError(f"unknown act {act!r}")
        return acc

    def resample(y, sel_ref):
        # Exact 0/1 selection matrix, run in bf16 on the MXU.
        return jnp.dot(y.astype(jnp.bfloat16), sel_ref[...],
                       preferred_element_type=jnp.float32)

    x = x_ref[...]                                       # [Cin_pad, M0p] f32

    # ---- enc0 ----
    e1 = conv("enc0_0", [x], 0, "lrelu")
    e1 = conv("enc0_1", [e1], 0, "lrelu")
    res1 = e1

    # ---- enc1: 4x4 stride-2 conv (no act) = dense eval + even subsample ----
    e2 = conv("enc1_down", [e1], 0, None)
    e2 = resample(e2, dn1_ref)
    e2 = conv("enc1_0", [e2], 1, "lrelu")
    e2 = conv("enc1_1", [e2], 1, "lrelu")
    res2 = e2

    # ---- central (with dilated 3x3 convs) ----
    c = conv("cen_down", [e2], 1, None)
    c = resample(c, dn2_ref)
    c = conv("cen_0", [c], 2, "lrelu")
    c = conv("cen_1", [c], 2, "lrelu")
    c = conv("cen_2", [c], 2, "lrelu")
    c = conv("cen_3", [c], 2, "lrelu")
    c = resample(c, up2_ref)
    c = conv("cen_up", [c], 1, "lrelu")

    # ---- dec1: cat([c, res2]) folded into the contraction dimension ----
    d1 = conv("dec1_0", [c, res2], 1, "lrelu")
    d1 = conv("dec1_1", [d1], 1, "lrelu")
    d1 = resample(d1, up1_ref)
    d1 = conv("dec1_up", [d1], 0, "lrelu")

    # ---- dec2: cat([d1, res1]) folded ----
    d2 = conv("dec2_0", [d1, res1], 0, "lrelu")
    d2 = conv("dec2_1", [d2], 0, "lrelu")

    # ---- end: 1x1 conv + tanh (Cout padded to 16 in the slab; slice back) ----
    out = conv("end", [d2], 0, "tanh")
    out_ref[...] = out[0:out_ch, :].astype(out_ref.dtype)


# ------------------------------ host-side plan ----------------------------- #

def _build_plan(params):
    """Static slab layout: per-layer column offset / K / padded Cout / bias index."""
    meta, off, rows, kmax = {}, 0, 0, 0
    for bidx, (name, ksize, dil, pad) in enumerate(_CONV_DEFS):
        kh, kw, cin, cout = params[name][0].shape
        assert kh == ksize and kw == ksize, name
        if name != "enc0_0":
            assert cin % _CTILE == 0, (name, cin)
        if name != "end":
            assert cout % _CTILE == 0, (name, cout)
        cin_p = _round_up(cin, _CTILE)
        cout_p = _round_up(cout, _CTILE)
        k = ksize * ksize * cin_p
        meta[name] = dict(off=off, k=k, cout=cout_p, bidx=bidx,
                          ksize=ksize, dil=dil, pad=pad, cin=cin_p)
        off += _round_up(k, _LANE)        # keep every weight slice lane-aligned
        rows = max(rows, cout_p)
        kmax = max(kmax, k)
    return meta, off, rows, kmax


def _pack_operands(params, meta, total_cols, rows):
    """Pack all weights into one bf16 slab [rows, total_cols] (layer i occupies
    rows [0, Cout_i), cols [off_i, off_i + K_i)) and all biases into one
    [rows, n_layers] f32 slab (column i = bias of layer i)."""
    w_slab = jnp.zeros((rows, total_cols), jnp.bfloat16)
    b_slab = jnp.zeros((rows, len(_CONV_DEFS)), jnp.float32)
    for bidx, (name, _, _, _) in enumerate(_CONV_DEFS):
        w, b = params[name]
        kh, kw, cin, cout = w.shape
        m = meta[name]
        if m["cin"] != cin:               # zero-pad input channels (enc0_0 only)
            w = jnp.pad(w, ((0, 0), (0, 0), (0, m["cin"] - cin), (0, 0)))
        # HWIO -> [Cout, kh*kw*Cin] with tap-major / channel-minor K ordering.
        w2d = jnp.transpose(w, (3, 0, 1, 2)).reshape(cout, m["k"])
        w_slab = w_slab.at[:cout, m["off"]:m["off"] + m["k"]].set(
            w2d.astype(jnp.bfloat16))
        b_slab = b_slab.at[:cout, bidx].set(b.astype(jnp.float32))
    return w_slab, b_slab


def _resample_mats(N, H, W):
    """Host-built exact 0/1 bf16 selection matrices for stride-2 subsampling and
    nearest-2x upsampling on the flat [C, N*H*W (padded to 128)] layout."""
    H2, W2, H4, W4 = H // 2, W // 2, H // 4, W // 4
    M0, M1, M2 = N * H * W, N * H2 * W2, N * H4 * W4
    M0p, M1p, M2p = (_round_up(m, _LANE) for m in (M0, M1, M2))

    def down(Hh, Ww, mi_p, mo, mo_p):
        Ho, Wo = Hh // 2, Ww // 2
        sel = np.zeros((mi_p, mo_p), np.float32)
        for o in range(mo):
            n, rem = divmod(o, Ho * Wo)
            io, jo = divmod(rem, Wo)
            sel[n * Hh * Ww + 2 * io * Ww + 2 * jo, o] = 1.0
        return jnp.asarray(sel, dtype=jnp.bfloat16)

    def up(Hh, Ww, mi_p, mo, mo_p):
        Ho, Wo = 2 * Hh, 2 * Ww
        sel = np.zeros((mi_p, mo_p), np.float32)
        for o in range(mo):
            n, rem = divmod(o, Ho * Wo)
            io, jo = divmod(rem, Wo)
            sel[n * Hh * Ww + (io // 2) * Ww + (jo // 2), o] = 1.0
        return jnp.asarray(sel, dtype=jnp.bfloat16)

    dn1 = down(H, W, M0p, M1, M1p)
    dn2 = down(H2, W2, M1p, M2, M2p)
    u2 = up(H4, W4, M2p, M1, M1p)
    u1 = up(H2, W2, M1p, M0, M0p)
    return dn1, dn2, u2, u1, (M0, M0p, M1p, M2p)


def diae_forward(params, x, *, roll_like_jnp=True):
    """x: NCHW float32 [N, in_ch, H, W]; H, W powers of two, divisible by 4."""
    N, C, H, W = x.shape
    assert H % 4 == 0 and W % 4 == 0
    assert (H & (H - 1)) == 0 and (W & (W - 1)) == 0

    meta, total_cols, rows, kmax = _build_plan(params)
    out_ch = params["end"][0].shape[3]
    c_pad = meta["enc0_0"]["cin"]
    assert C <= c_pad

    dn1, dn2, u2, u1, (M0, M0p, M1p, M2p) = _resample_mats(N, H, W)
    geom = ((H, W, M0p), (H // 2, W // 2, M1p), (H // 4, W // 4, M2p))

    w_slab, b_slab = _pack_operands(params, meta, total_cols, rows)

    # [N, C, H, W] -> [C_pad, N*H*W (lane-padded)]  (batch folded onto lanes)
    x_flat = jnp.transpose(x, (1, 0, 2, 3)).reshape(C, M0)
    x_flat = jnp.pad(x_flat, ((0, c_pad - C), (0, M0p - M0)))

    operands = (x_flat, w_slab, b_slab, dn1, dn2, u2, u1)
    in_specs = [pl.BlockSpec(op.shape, lambda i: (0, 0)) for op in operands]

    out = pl.pallas_call(
        functools.partial(_diae_kernel, meta=meta, geom=geom, out_ch=out_ch,
                          roll_like_jnp=roll_like_jnp),
        out_shape=jax.ShapeDtypeStruct((out_ch, M0p), jnp.float32),
        grid=(1,),
        in_specs=in_specs,
        out_specs=pl.BlockSpec((out_ch, M0p), lambda i: (0, 0)),
        scratch_shapes=[pltpu.VMEM((kmax, M0p), jnp.bfloat16)],   # tap stack
        compiler_params=pltpu.CompilerParams(
            dimension_semantics=("arbitrary",),
            vmem_limit_bytes=32 * 1024 * 1024,
        ),
    )(*operands)

    out = out[:, :M0]
    return jnp.transpose(out.reshape(out_ch, N, H, W), (1, 0, 2, 3))


# --------------------- roll-direction probe (one-off) ---------------------- #

def _probe_roll_matches_jnp():
    """True iff pltpu.roll follows jnp.roll semantics (out[i] = in[(i-shift)%n])."""
    def kern(x_ref, o_ref):
        o_ref[...] = pltpu.roll(x_ref[...], 1, 1)

    x = lax.broadcasted_iota(jnp.int32, (8, 128), 1)
    y = pl.pallas_call(
        kern,
        out_shape=jax.ShapeDtypeStruct((8, 128), jnp.int32),
        grid=(1,),
        in_specs=[pl.BlockSpec((8, 128), lambda i: (0, 0))],
        out_specs=pl.BlockSpec((8, 128), lambda i: (0, 0)),
    )(x)
    return int(y[0, 1]) == 0


# ------------------------- pure-JAX reference model ------------------------ #

def _conv_ref(x, w, b, *, stride=1, padding=0, dilation=1):
    y = lax.conv_general_dilated(
        x.astype(jnp.bfloat16), w.astype(jnp.bfloat16),
        window_strides=(stride, stride),
        padding=((padding, padding), (padding, padding)),
        rhs_dilation=(dilation, dilation),
        dimension_numbers=("NCHW", "HWIO", "NCHW"),
        preferred_element_type=jnp.float32)
    return y + b.reshape(1, -1, 1, 1)


def _lrelu(x):
    return jnp.where(x >= 0, x, NEG_SLOPE * x)


def _up2_ref(x):  # nearest 2x, NCHW
    return jnp.repeat(jnp.repeat(x, 2, axis=2), 2, axis=3)


def diae_forward_ref(params, x):
    p = params
    e1 = _lrelu(_conv_ref(x, *p["enc0_0"], padding=1))
    e1 = _lrelu(_conv_ref(e1, *p["enc0_1"], padding=1))
    res1 = e1
    e2 = _conv_ref(e1, *p["enc1_down"], stride=2, padding=1)
    e2 = _lrelu(_conv_ref(e2, *p["enc1_0"], padding=1))
    e2 = _lrelu(_conv_ref(e2, *p["enc1_1"], padding=1))
    res2 = e2
    c = _conv_ref(e2, *p["cen_down"], stride=2, padding=1)
    c = _lrelu(_conv_ref(c, *p["cen_0"], padding=1))
    c = _lrelu(_conv_ref(c, *p["cen_1"], padding=2, dilation=2))
    c = _lrelu(_conv_ref(c, *p["cen_2"], padding=2, dilation=2))
    c = _lrelu(_conv_ref(c, *p["cen_3"], padding=1))
    c = _lrelu(_conv_ref(_up2_ref(c), *p["cen_up"], padding=1))
    d1 = jnp.concatenate([c, res2], axis=1)
    d1 = _lrelu(_conv_ref(d1, *p["dec1_0"], padding=1))
    d1 = _lrelu(_conv_ref(d1, *p["dec1_1"], padding=1))
    d1 = _lrelu(_conv_ref(_up2_ref(d1), *p["dec1_up"], padding=1))
    d2 = jnp.concatenate([d1, res1], axis=1)
    d2 = _lrelu(_conv_ref(d2, *p["dec2_0"], padding=1))
    d2 = _lrelu(_conv_ref(d2, *p["dec2_1"], padding=1))
    return jnp.tanh(_conv_ref(d2, *p["end"], padding=0))


# ---------------------------- parameter setup ------------------------------ #

def _make_conv_params(key, kh, kw, cin, cout):
    kw_key, kb_key = jax.random.split(key)
    fan_in = kh * kw * cin
    w = jax.random.normal(kw_key, (kh, kw, cin, cout), jnp.float32) / math.sqrt(fan_in)
    b = 0.01 * jax.random.normal(kb_key, (cout,), jnp.float32)
    return w, b


def init_params(key, in_ch=3, nf=16):
    specs = [
        ("enc0_0", (3, 3, in_ch, nf)), ("enc0_1", (3, 3, nf, nf)),
        ("enc1_down", (4, 4, nf, 2 * nf)),
        ("enc1_0", (3, 3, 2 * nf, 2 * nf)), ("enc1_1", (3, 3, 2 * nf, 2 * nf)),
        ("cen_down", (4, 4, 2 * nf, 4 * nf)),
        ("cen_0", (3, 3, 4 * nf, 4 * nf)), ("cen_1", (3, 3, 4 * nf, 4 * nf)),
        ("cen_2", (3, 3, 4 * nf, 4 * nf)), ("cen_3", (3, 3, 4 * nf, 4 * nf)),
        ("cen_up", (3, 3, 4 * nf, 2 * nf)),
        ("dec1_0", (3, 3, 4 * nf, 2 * nf)), ("dec1_1", (3, 3, 2 * nf, 2 * nf)),
        ("dec1_up", (3, 3, 2 * nf, nf)),
        ("dec2_0", (3, 3, 2 * nf, nf)), ("dec2_1", (3, 3, nf, nf)),
        ("end", (1, 1, nf, in_ch)),
    ]
    keys = jax.random.split(key, len(specs))
    return {name: _make_conv_params(k, *shape) for k, (name, shape) in zip(keys, specs)}


if __name__ == "__main__":
    key = jax.random.PRNGKey(0)
    pkey, xkey = jax.random.split(key)
    params = init_params(pkey, in_ch=3, nf=16)
    # NCHW input matching the PyTorch module: [2, 3, 16, 16]
    x = jax.random.normal(xkey, (2, 3, 16, 16), jnp.float32)

    roll_jnp = _probe_roll_matches_jnp()
    fwd = jax.jit(functools.partial(diae_forward, roll_like_jnp=roll_jnp))
    out = fwd(params, x)
    jax.block_until_ready(out)
    assert out.shape == (2, 3, 16, 16), out.shape
    assert bool(jnp.all(jnp.isfinite(out)))

    # Tolerance-check against a bf16-matched pure-JAX reference.
    ref = jax.jit(diae_forward_ref)(params, x)
    denom = float(jnp.max(jnp.abs(ref))) + 1e-6
    rel_err = float(jnp.max(jnp.abs(out - ref))) / denom
    assert rel_err < 5e-2, f"mismatch vs pure-JAX reference: rel err {rel_err:.3e}"

    print("KERNEL_OK")
</pallas_src>

<mosaic_0001>
module attributes {stable_mosaic.version = 11 : i64} {
  func.func @kern(%arg0: i32, %arg1: memref<8x128xi32, #tpu.memory_space<vmem>>, %arg2: memref<8x128xi32, #tpu.memory_space<vmem>>) attributes {dimension_semantics = [#tpu.dimension_semantics<arbitrary>], iteration_bounds = array<i64: 1>, scalar_prefetch = 0 : i64, scratch_operands = 0 : i64, tpu.core_type = #tpu.core_type<tc>, window_params = [{pipeline_mode = #tpu.pipeline_mode<synchronous>, transform_indices = @transform_0, window_bounds = array<i64: 8, 128>}, {pipeline_mode = #tpu.pipeline_mode<synchronous>, transform_indices = @transform_1, window_bounds = array<i64: 8, 128>}]} {
    %c0 = arith.constant 0 : index
    %c0_0 = arith.constant 0 : index
    %0 = vector.load %arg1[%c0, %c0_0] : memref<8x128xi32, #tpu.memory_space<vmem>>, vector<8x128xi32>
    %c1_i32 = arith.constant 1 : i32
    %1 = tpu.dynamic_rotate %0 by %c1_i32 dim 1 : vector<8x128xi32>, i32 -> vector<8x128xi32>
    %c0_1 = arith.constant 0 : index
    %c0_2 = arith.constant 0 : index
    %2 = vector.load %arg2[%c0_1, %c0_2] : memref<8x128xi32, #tpu.memory_space<vmem>>, vector<8x128xi32>
    tpu.vector_store %arg2[%c0_1, %c0_2], %1 {strides = array<i32>} : memref<8x128xi32, #tpu.memory_space<vmem>>, vector<8x128xi32>,
    return
  }
  func.func @transform_0(%arg0: i32) -> (i32, i32) {
    %c0_i32 = arith.constant 0 : i32
    %c0_i32_0 = arith.constant 0 : i32
    %c0_i32_1 = arith.constant 0 : i32
    return %c0_i32, %c0_i32_0 : i32, i32
  }
  func.func @transform_1(%arg0: i32) -> (i32, i32) {
    %c0_i32 = arith.constant 0 : i32
    %c0_i32_0 = arith.constant 0 : i32
    %c0_i32_1 = arith.constant 0 : i32
    return %c0_i32, %c0_i32_0 : i32, i32
  }
}

</mosaic_0001>

<llo_original>
// kernel: tpu_custom_call.1
$region0: #{tpu_custom_call.1}
  #allocation0 [shape = 'u32[]', space=smem, size = 0x4, offset = 0x4, fixed_abs, tag = 'smem constant byte address 0x4 - core index']
  #allocation1 [shape = 'u32[72,128]{1,0:T(1,128)}', space=vmem, size = 0x9000, scoped, tag = 'internal scratch']
  %s0 = inlined_call_operand.hbm [shape: s32[8,128], index: 0, kind: input, shape index: {}]
  %s1 = inlined_call_operand.hbm [shape: s32[8,128], index: 1, kind: output, shape index: {}]
  %s2 = sld [smem:[#allocation0]]
  $region18: #{tpu_custom_call.1} parent=0
    _
  %s4 = ssub.s32 1, %s2
  %s5 = scalar_select 0, %s4, %s2
  $region1: #{tpu_custom_call.1} parent=0
    #allocation2 [shape = 'u8[4096]{0}', space=vmem, size = 0x1000, scoped, tag = 'input window, operand 0, single buffered']
    #allocation3 [shape = 's32[1]{0}', space=sflag, size = 0x4, scoped, tag = 'scoped memory for tpu_custom_call.1']
    #allocation4 [shape = 's32[1]{0}', space=sflag, size = 0x4, scoped, tag = 'scoped memory for tpu_custom_call.1']
    #allocation5 [shape = 'u8[4096]{0}', space=vmem, size = 0x1000, scoped, tag = 'output window, operand 0, single buffered']
    %6 = vsyncpa [#allocation3], 0
    %7 = vsyncpa [#allocation4], 0
    // Predicated region
    $region2: #{tpu_custom_call.1} parent=1 // pred_check
      _
    $region3: #{tpu_custom_call.1} parent=1 // pred_check_branch
      %9 = sbr.rel (0) target = $region5
    $region4: #{tpu_custom_call.1} parent=1 // pred_region
      %11 = vsyncadd [#allocation3], 0
      %s13 = sshll.u32 %s0, 4
      %s14 = int_to_ptr.hbm [resolvable:$true] %s13
      %s15 = sshll.u32 [#allocation2], 4
      %s16 = int_to_ptr.vmem [resolvable:$true] %s15
      %18 = dma.hbm_to_vmem [thread:$0]  %s14, 128, %s16, [#allocation3]
    $region5: #{tpu_custom_call.1} parent=1 // pred_fallthru
      _
    // Predicated region
    $region6: #{tpu_custom_call.1} parent=1 // pred_check
      _
    $region7: #{tpu_custom_call.1} parent=1 // pred_check_branch
      %20 = sbr.rel (0) target = $region9
    $region8: #{tpu_custom_call.1} parent=1 // pred_region
      %22 = dma.done [#allocation3], 128
    $region9: #{tpu_custom_call.1} parent=1 // pred_fallthru
      _
    %v23 = vld [vmem:[#allocation2] sm:$0xff]
    %24 = vrot.lane.b32.xlu0 %v23, 1
    %v25 = vpop.permute.xlu0 %24
    %26 = vst [vmem:[#allocation5] sm:$0xff] %v25
    // Predicated region
    $region10: #{tpu_custom_call.1} parent=1 // pred_check
      _
    $region11: #{tpu_custom_call.1} parent=1 // pred_check_branch
      %28 = sbr.rel (0) target = $region13
    $region12: #{tpu_custom_call.1} parent=1 // pred_region
      %30 = vsyncadd [#allocation4], 0
      %s32 = sshll.u32 [#allocation5], 4
      %s33 = int_to_ptr.vmem [resolvable:$true] %s32
      %s34 = sshll.u32 %s1, 4
      %s35 = int_to_ptr.hbm [resolvable:$true] %s34
      %37 = dma.vmem_to_hbm [thread:$0]  %s33, 128, %s35, [#allocation4]
    $region13: #{tpu_custom_call.1} parent=1 // pred_fallthru
      _
    // Predicated region
    $region14: #{tpu_custom_call.1} parent=1 // pred_check
      _
    $region15: #{tpu_custom_call.1} parent=1 // pred_check_branch
      %39 = sbr.rel (0) target = $region17
    $region16: #{tpu_custom_call.1} parent=1 // pred_region
      %41 = dma.done [#allocation4], 128
    $region17: #{tpu_custom_call.1} parent=1 // pred_fallthru
      _
    %42 = vsyncpa [#allocation3], 1
    %43 = vsyncpa [#allocation4], 1

</llo_original>
